<compile_context>
chip_gen: v7x
topology: tpu7x:2x2x1
jax: 0.10.0
libtpu: 0.0.40
codegen_flags: <defaults>
</compile_context>

<pallas_src>
import functools

import jax
import jax.numpy as jnp
from jax.experimental import pallas as pl
from jax.experimental.pallas import tpu as pltpu

LANE = 128


def _round_up(x, m):
    return ((x + m - 1) // m) * m


# ----------------------------------------------------------------------------
# Kernel
# ----------------------------------------------------------------------------
def initial_model_kernel(
    obs_ref,                                  # (bt, O)   f32 (cast in-kernel)
    w1r_ref, b1r_ref, w2r_ref, b2r_ref,       # representation net (lane-padded)
    w1f_ref, b1f_ref, w2vp_ref, b2vp_ref,     # folded+fused value/policy heads
    out_ref,                                  # (bt, LP + HEADP)  out dtype
):
    cdt = w1r_ref.dtype                       # MXU operand dtype (f32 or bf16)
    obs = obs_ref[...].astype(cdt)            # (bt, O) — no wrapper pad/cast

    # representation_net: Linear -> ReLU -> Linear   (f32 accumulation)
    h = jnp.dot(obs, w1r_ref[...], preferred_element_type=jnp.float32) + b1r_ref[...]
    h = jnp.maximum(h, 0.0).astype(cdt)       # (bt, HP)
    latent = jnp.dot(h, w2r_ref[...], preferred_element_type=jnp.float32) + b2r_ref[...]

    # value & policy heads: their (fused) first layer is folded through w2r at
    # pack time, so it depends only on h — the serial matmul chain is 3 deep
    # instead of 4, and this matmul is K=HP, N=2*HP (fills a 256-wide MXU).
    hvp = jnp.dot(h, w1f_ref[...], preferred_element_type=jnp.float32) + b1f_ref[...]
    hvp = jnp.maximum(hvp, 0.0).astype(cdt)   # (bt, 2*HP)
    heads = jnp.dot(hvp, w2vp_ref[...], preferred_element_type=jnp.float32) + b2vp_ref[...]

    # One lane-dense slab: [ latent | value, policy_logits, zero-pad ].
    out_ref[...] = jnp.concatenate([latent, heads], axis=-1).astype(out_ref.dtype)


# ----------------------------------------------------------------------------
# Parameter packing (call ONCE per params change, reuse across forward calls):
#   * pad feature dims to multiples of 128 (obs dim is left unpadded — the
#     kernel contracts directly over O),
#   * fuse value/policy first & second layers,
#   * fold w2r @ w1vp in f32 (no ReLU between them), cast MXU operands once.
# ----------------------------------------------------------------------------
def pack_params(params, compute_dtype=jnp.bfloat16):
    O, H = params["w1r"].shape
    _, L = params["w2r"].shape
    _, A = params["w2p"].shape
    HP, LP = _round_up(H, LANE), _round_up(L, LANE)
    HEADP = _round_up(1 + A, LANE)            # value (1) + policy (A) -> 128

    def pad2(x, rows, cols):
        return jnp.zeros((rows, cols), jnp.float32).at[: x.shape[0], : x.shape[1]].set(x)

    w1r = pad2(params["w1r"], O, HP)          # rows unpadded: obs passed as-is
    b1r = pad2(params["b1r"], 1, HP)
    w2r = pad2(params["w2r"], HP, LP)
    b2r = pad2(params["b2r"], 1, LP)

    # Fused value+policy first layer on the latent, then folded through w2r.
    w1vp = (jnp.zeros((LP, 2 * HP), jnp.float32)
            .at[:L, :H].set(params["w1v"])
            .at[:L, HP:HP + H].set(params["w1p"]))
    b1vp = (jnp.zeros((1, 2 * HP), jnp.float32)
            .at[:, :H].set(params["b1v"])
            .at[:, HP:HP + H].set(params["b1p"]))
    w1f = w2r @ w1vp                          # (HP, 2*HP)  f32 fold
    b1f = b2r @ w1vp + b1vp                   # (1,  2*HP)  f32 fold

    # Fused second layers: columns = (value | policy_logits | zero padding).
    w2vp = (jnp.zeros((2 * HP, HEADP), jnp.float32)
            .at[:H, 0:1].set(params["w2v"])
            .at[HP:HP + H, 1:1 + A].set(params["w2p"]))
    b2vp = (jnp.zeros((1, HEADP), jnp.float32)
            .at[:, 0:1].set(params["b2v"])
            .at[:, 1:1 + A].set(params["b2p"]))

    packed = (w1r.astype(compute_dtype), b1r,
              w2r.astype(compute_dtype), b2r,
              w1f.astype(compute_dtype), b1f,
              w2vp.astype(compute_dtype), b2vp)
    dims = dict(O=O, H=H, L=L, A=A, HP=HP, LP=LP, HEADP=HEADP)
    return packed, dims


# ----------------------------------------------------------------------------
# Forward pass on pre-packed weights (jitted; weights are reused across calls).
# ----------------------------------------------------------------------------
@functools.partial(jax.jit, static_argnames=("L", "A", "batch_tile", "out_dtype"))
def initial_model_packed(obs, packed, *, L, A, batch_tile=512, out_dtype=None):
    """obs: [B, O] f32.  Returns (latent[B,L], value[B,1], policy_logits[B,A])."""
    B, O = obs.shape
    w1r, b1r, w2r, b2r, w1f, b1f, w2vp, b2vp = packed
    cdt = w1r.dtype
    odt = cdt if out_dtype is None else out_dtype
    HP, LP, HEADP = w1r.shape[1], w2r.shape[1], w2vp.shape[1]
    OUTW = LP + HEADP

    # Batch tiling: 16-row sublane granularity for bf16 operands, 8 otherwise.
    sub = 16 if cdt == jnp.bfloat16 else 8
    B_sub = _round_up(B, sub)
    bt = min(_round_up(batch_tile, sub), B_sub)
    # Keep >= 2 grid tiles when the batch allows so v7x's two TensorCores both
    # get work under dimension_semantics=("parallel",).
    if B_sub // bt < 2 and B_sub >= 2 * sub:
        bt = _round_up(pl.cdiv(B_sub, 2), sub)
    num_tiles = pl.cdiv(B_sub, bt)
    B_pad = num_tiles * bt

    # Only the batch dim is (possibly) padded; the O=feature dim is untouched.
    obs_in = obs if B_pad == B else jnp.pad(obs, ((0, B_pad - B), (0, 0)))

    def resident(arr):                         # stays VMEM-resident across tiles
        return pl.BlockSpec(arr.shape, lambda i: (0, 0))

    weights = (w1r, b1r, w2r, b2r, w1f, b1f, w2vp, b2vp)
    in_specs = [pl.BlockSpec((bt, O), lambda i: (i, 0))] + [resident(w) for w in weights]
    out_specs = pl.BlockSpec((bt, OUTW), lambda i: (i, 0))
    out_shape = jax.ShapeDtypeStruct((B_pad, OUTW), odt)

    flops = 2 * B_pad * (O * HP + HP * LP + HP * (2 * HP) + (2 * HP) * HEADP)
    bytes_accessed = (
        obs_in.size * obs_in.dtype.itemsize
        + sum(int(w.size) * jnp.dtype(w.dtype).itemsize for w in weights)
        + B_pad * OUTW * jnp.dtype(odt).itemsize)

    slab = pl.pallas_call(
        initial_model_kernel,
        out_shape=out_shape,
        grid=(num_tiles,),
        in_specs=in_specs,
        out_specs=out_specs,
        compiler_params=pltpu.CompilerParams(
            dimension_semantics=("parallel",),   # shards tiles across TCs on v7x
            vmem_limit_bytes=32 * 1024 * 1024,
        ),
        cost_estimate=pl.CostEstimate(
            flops=flops, transcendentals=0, bytes_accessed=bytes_accessed),
    )(obs_in, *weights)

    latent = slab[:B, :L]
    value = slab[:B, LP:LP + 1]
    policy_logits = slab[:B, LP + 1:LP + 1 + A]
    return latent, value, policy_logits


def initial_model(obs, params, *, compute_dtype=jnp.bfloat16, batch_tile=512,
                  out_dtype=None):
    """Convenience wrapper (packs every call). Prefer pack_params once +
    initial_model_packed for repeated inference."""
    packed, d = pack_params(params, compute_dtype)
    return initial_model_packed(obs, packed, L=d["L"], A=d["A"],
                                batch_tile=batch_tile, out_dtype=out_dtype)


# ----------------------------------------------------------------------------
# Parameter init + pure-JAX reference (logical, unpadded shapes)
# ----------------------------------------------------------------------------
def init_params(key, obs_dim, hidden, latent, actions):
    ks = jax.random.split(key, 6)

    def lin(k, fan_in, fan_out):
        scale = 1.0 / jnp.sqrt(fan_in)
        return jax.random.uniform(k, (fan_in, fan_out), jnp.float32, -scale, scale)

    return {
        "w1r": lin(ks[0], obs_dim, hidden), "b1r": jnp.zeros((1, hidden), jnp.float32),
        "w2r": lin(ks[1], hidden, latent),  "b2r": jnp.zeros((1, latent), jnp.float32),
        "w1v": lin(ks[2], latent, hidden),  "b1v": jnp.zeros((1, hidden), jnp.float32),
        "w2v": lin(ks[3], hidden, 1),       "b2v": jnp.zeros((1, 1), jnp.float32),
        "w1p": lin(ks[4], latent, hidden),  "b1p": jnp.zeros((1, hidden), jnp.float32),
        "w2p": lin(ks[5], hidden, actions), "b2p": jnp.zeros((1, actions), jnp.float32),
    }


def initial_model_ref(obs, p):
    h = jnp.maximum(obs @ p["w1r"] + p["b1r"], 0.0)
    latent = h @ p["w2r"] + p["b2r"]
    hv = jnp.maximum(latent @ p["w1v"] + p["b1v"], 0.0)
    value = hv @ p["w2v"] + p["b2v"]
    hp = jnp.maximum(latent @ p["w1p"] + p["b1p"], 0.0)
    logits = hp @ p["w2p"] + p["b2p"]
    return latent, value, logits


if __name__ == "__main__":
    B, OBS, HID, LAT, ACT = 8, 16, 32, 32, 8

    key = jax.random.PRNGKey(0)
    k_obs, k_params = jax.random.split(key)
    obs = jax.random.normal(k_obs, (B, OBS), jnp.float32)
    params = init_params(k_params, OBS, HID, LAT, ACT)

    lr, vr, pr = initial_model_ref(obs, params)

    # f32 operand path (numerically tight) — pack once, reuse across calls.
    packed32, d32 = pack_params(params, compute_dtype=jnp.float32)
    l32, v32, p32 = initial_model_packed(obs, packed32, L=d32["L"], A=d32["A"])
    jax.block_until_ready((l32, v32, p32))
    assert jnp.allclose(l32, lr, atol=2e-3), "latent mismatch (f32)"
    assert jnp.allclose(v32, vr, atol=2e-3), "value mismatch (f32)"
    assert jnp.allclose(p32, pr, atol=2e-3), "policy mismatch (f32)"

    # bf16 operand + bf16 output path (fast path; f32 MXU accumulation).
    packedbf, dbf = pack_params(params, compute_dtype=jnp.bfloat16)
    lbf, vbf, pbf = initial_model_packed(obs, packedbf, L=dbf["L"], A=dbf["A"])
    jax.block_until_ready((lbf, vbf, pbf))
    assert jnp.allclose(lbf.astype(jnp.float32), lr, atol=5e-2), "latent mismatch (bf16)"
    assert jnp.allclose(vbf.astype(jnp.float32), vr, atol=5e-2), "value mismatch (bf16)"
    assert jnp.allclose(pbf.astype(jnp.float32), pr, atol=5e-2), "policy mismatch (bf16)"

    print("KERNEL_OK")
</pallas_src>

<mosaic_0001>
module attributes {stable_mosaic.version = 11 : i64} {
  func.func @initial_model_kernel(%arg0: i32, %arg1: memref<8x16xf32, #tpu.memory_space<vmem>>, %arg2: memref<16x128xf32, #tpu.memory_space<vmem>>, %arg3: memref<1x128xf32, #tpu.memory_space<vmem>>, %arg4: memref<128x128xf32, #tpu.memory_space<vmem>>, %arg5: memref<1x128xf32, #tpu.memory_space<vmem>>, %arg6: memref<128x256xf32, #tpu.memory_space<vmem>>, %arg7: memref<1x256xf32, #tpu.memory_space<vmem>>, %arg8: memref<256x128xf32, #tpu.memory_space<vmem>>, %arg9: memref<1x128xf32, #tpu.memory_space<vmem>>, %arg10: memref<8x256xf32, #tpu.memory_space<vmem>>) attributes {dimension_semantics = [#tpu.dimension_semantics<parallel>], iteration_bounds = array<i64: 1>, scalar_prefetch = 0 : i64, scratch_operands = 0 : i64, tpu.core_type = #tpu.core_type<tc>, window_params = [{transform_indices = @transform_0, window_bounds = array<i64: 8, 16>}, {pipeline_mode = #tpu.pipeline_mode<synchronous>, transform_indices = @transform_1, window_bounds = array<i64: 16, 128>}, {pipeline_mode = #tpu.pipeline_mode<synchronous>, transform_indices = @transform_2, window_bounds = array<i64: 1, 128>}, {pipeline_mode = #tpu.pipeline_mode<synchronous>, transform_indices = @transform_3, window_bounds = array<i64: 128, 128>}, {pipeline_mode = #tpu.pipeline_mode<synchronous>, transform_indices = @transform_4, window_bounds = array<i64: 1, 128>}, {pipeline_mode = #tpu.pipeline_mode<synchronous>, transform_indices = @transform_5, window_bounds = array<i64: 128, 256>}, {pipeline_mode = #tpu.pipeline_mode<synchronous>, transform_indices = @transform_6, window_bounds = array<i64: 1, 256>}, {pipeline_mode = #tpu.pipeline_mode<synchronous>, transform_indices = @transform_7, window_bounds = array<i64: 256, 128>}, {pipeline_mode = #tpu.pipeline_mode<synchronous>, transform_indices = @transform_8, window_bounds = array<i64: 1, 128>}, {transform_indices = @transform_9, window_bounds = array<i64: 8, 256>}]} {
    %c0 = arith.constant 0 : index
    %c0_0 = arith.constant 0 : index
    %0 = vector.load %arg1[%c0, %c0_0] : memref<8x16xf32, #tpu.memory_space<vmem>>, vector<8x16xf32>
    %c0_1 = arith.constant 0 : index
    %c0_2 = arith.constant 0 : index
    %1 = vector.load %arg2[%c0_1, %c0_2] : memref<16x128xf32, #tpu.memory_space<vmem>>, vector<16x128xf32>
    %cst = arith.constant dense<0.000000e+00> : vector<8x128xf32>
    %2 = tpu.matmul %0, %1, %cst {dimension_numbers = #tpu.dot_dimension_numbers<[1], [0], [0], [1], [0, 0, 1, 1], [], []>} : vector<8x16xf32>, vector<16x128xf32>, vector<8x128xf32> -> vector<8x128xf32>
    %c0_3 = arith.constant 0 : index
    %c0_4 = arith.constant 0 : index
    %3 = vector.load %arg3[%c0_3, %c0_4] : memref<1x128xf32, #tpu.memory_space<vmem>>, vector<1x128xf32>
    %4 = vector.broadcast %3 : vector<1x128xf32> to vector<8x128xf32>
    %5 = arith.addf %2, %4 : vector<8x128xf32>
    %cst_5 = arith.constant 0.000000e+00 : f32
    %6 = vector.broadcast %cst_5 : f32 to vector<8x128xf32>
    %7 = arith.maximumf %5, %6 : vector<8x128xf32>
    %c0_6 = arith.constant 0 : index
    %c0_7 = arith.constant 0 : index
    %8 = vector.load %arg4[%c0_6, %c0_7] : memref<128x128xf32, #tpu.memory_space<vmem>>, vector<128x128xf32>
    %cst_8 = arith.constant dense<0.000000e+00> : vector<8x128xf32>
    %9 = tpu.matmul %7, %8, %cst_8 {dimension_numbers = #tpu.dot_dimension_numbers<[1], [0], [0], [1], [0, 0, 1, 1], [], []>} : vector<8x128xf32>, vector<128x128xf32>, vector<8x128xf32> -> vector<8x128xf32>
    %c0_9 = arith.constant 0 : index
    %c0_10 = arith.constant 0 : index
    %10 = vector.load %arg5[%c0_9, %c0_10] : memref<1x128xf32, #tpu.memory_space<vmem>>, vector<1x128xf32>
    %11 = vector.broadcast %10 : vector<1x128xf32> to vector<8x128xf32>
    %12 = arith.addf %9, %11 : vector<8x128xf32>
    %c0_11 = arith.constant 0 : index
    %c0_12 = arith.constant 0 : index
    %13 = vector.load %arg6[%c0_11, %c0_12] : memref<128x256xf32, #tpu.memory_space<vmem>>, vector<128x256xf32>
    %cst_13 = arith.constant dense<0.000000e+00> : vector<8x256xf32>
    %14 = tpu.matmul %7, %13, %cst_13 {dimension_numbers = #tpu.dot_dimension_numbers<[1], [0], [0], [1], [0, 0, 1, 1], [], []>} : vector<8x128xf32>, vector<128x256xf32>, vector<8x256xf32> -> vector<8x256xf32>
    %c0_14 = arith.constant 0 : index
    %c0_15 = arith.constant 0 : index
    %15 = vector.load %arg7[%c0_14, %c0_15] : memref<1x256xf32, #tpu.memory_space<vmem>>, vector<1x256xf32>
    %16 = vector.broadcast %15 : vector<1x256xf32> to vector<8x256xf32>
    %17 = arith.addf %14, %16 : vector<8x256xf32>
    %cst_16 = arith.constant 0.000000e+00 : f32
    %18 = vector.broadcast %cst_16 : f32 to vector<8x256xf32>
    %19 = arith.maximumf %17, %18 : vector<8x256xf32>
    %c0_17 = arith.constant 0 : index
    %c0_18 = arith.constant 0 : index
    %20 = vector.load %arg8[%c0_17, %c0_18] : memref<256x128xf32, #tpu.memory_space<vmem>>, vector<256x128xf32>
    %cst_19 = arith.constant dense<0.000000e+00> : vector<8x128xf32>
    %21 = tpu.matmul %19, %20, %cst_19 {dimension_numbers = #tpu.dot_dimension_numbers<[1], [0], [0], [1], [0, 0, 1, 1], [], []>} : vector<8x256xf32>, vector<256x128xf32>, vector<8x128xf32> -> vector<8x128xf32>
    %c0_20 = arith.constant 0 : index
    %c0_21 = arith.constant 0 : index
    %22 = vector.load %arg9[%c0_20, %c0_21] : memref<1x128xf32, #tpu.memory_space<vmem>>, vector<1x128xf32>
    %23 = vector.broadcast %22 : vector<1x128xf32> to vector<8x128xf32>
    %24 = arith.addf %21, %23 : vector<8x128xf32>
    %25 = tpu.concatenate %12, %24 in 1 : vector<8x128xf32>, vector<8x128xf32> -> vector<8x256xf32>
    %c0_22 = arith.constant 0 : index
    %c0_23 = arith.constant 0 : index
    %26 = vector.load %arg10[%c0_22, %c0_23] : memref<8x256xf32, #tpu.memory_space<vmem>>, vector<8x256xf32>
    tpu.vector_store %arg10[%c0_22, %c0_23], %25 {strides = array<i32>} : memref<8x256xf32, #tpu.memory_space<vmem>>, vector<8x256xf32>,
    return
  }
  func.func @transform_0(%arg0: i32) -> (i32, i32) {
    %c0_i32 = arith.constant 0 : i32
    %c0_i32_0 = arith.constant 0 : i32
    return %arg0, %c0_i32 : i32, i32
  }
  func.func @transform_1(%arg0: i32) -> (i32, i32) {
    %c0_i32 = arith.constant 0 : i32
    %c0_i32_0 = arith.constant 0 : i32
    %c0_i32_1 = arith.constant 0 : i32
    return %c0_i32, %c0_i32_0 : i32, i32
  }
  func.func @transform_2(%arg0: i32) -> (i32, i32) {
    %c0_i32 = arith.constant 0 : i32
    %c0_i32_0 = arith.constant 0 : i32
    %c0_i32_1 = arith.constant 0 : i32
    return %c0_i32, %c0_i32_0 : i32, i32
  }
  func.func @transform_3(%arg0: i32) -> (i32, i32) {
    %c0_i32 = arith.constant 0 : i32
    %c0_i32_0 = arith.constant 0 : i32
    %c0_i32_1 = arith.constant 0 : i32
    return %c0_i32, %c0_i32_0 : i32, i32
  }
  func.func @transform_4(%arg0: i32) -> (i32, i32) {
    %c0_i32 = arith.constant 0 : i32
    %c0_i32_0 = arith.constant 0 : i32
    %c0_i32_1 = arith.constant 0 : i32
    return %c0_i32, %c0_i32_0 : i32, i32
  }
  func.func @transform_5(%arg0: i32) -> (i32, i32) {
    %c0_i32 = arith.constant 0 : i32
    %c0_i32_0 = arith.constant 0 : i32
    %c0_i32_1 = arith.constant 0 : i32
    return %c0_i32, %c0_i32_0 : i32, i32
  }
  func.func @transform_6(%arg0: i32) -> (i32, i32) {
    %c0_i32 = arith.constant 0 : i32
    %c0_i32_0 = arith.constant 0 : i32
    %c0_i32_1 = arith.constant 0 : i32
    return %c0_i32, %c0_i32_0 : i32, i32
  }
  func.func @transform_7(%arg0: i32) -> (i32, i32) {
    %c0_i32 = arith.constant 0 : i32
    %c0_i32_0 = arith.constant 0 : i32
    %c0_i32_1 = arith.constant 0 : i32
    return %c0_i32, %c0_i32_0 : i32, i32
  }
  func.func @transform_8(%arg0: i32) -> (i32, i32) {
    %c0_i32 = arith.constant 0 : i32
    %c0_i32_0 = arith.constant 0 : i32
    %c0_i32_1 = arith.constant 0 : i32
    return %c0_i32, %c0_i32_0 : i32, i32
  }
  func.func @transform_9(%arg0: i32) -> (i32, i32) {
    %c0_i32 = arith.constant 0 : i32
    %c0_i32_0 = arith.constant 0 : i32
    return %arg0, %c0_i32 : i32, i32
  }
}

</mosaic_0001>

<llo_original>
// kernel: initial_model_packed.1
$region0: #{initial_model_packed.1}
  #allocation0 [shape = 'u32[]', space=smem, size = 0x4, offset = 0x4, fixed_abs, tag = 'smem constant byte address 0x4 - core index']
  #allocation1 [shape = 'u32[144,128]{1,0:T(1,128)}', space=vmem, size = 0x12000, scoped, tag = 'internal scratch']
  %s0 = inlined_call_operand.vmem [shape: f32[8,16], index: 0, kind: input, shape index: {}]
  %s1 = inlined_call_operand.vmem [shape: f32[16,128], index: 1, kind: input, shape index: {}]
  %s2 = inlined_call_operand.hbm [shape: f32[1,128], index: 2, kind: input, shape index: {}]
  %s3 = inlined_call_operand.hbm [shape: f32[128,128], index: 3, kind: input, shape index: {}]
  %s4 = inlined_call_operand.hbm [shape: f32[1,128], index: 4, kind: input, shape index: {}]
  %s5 = inlined_call_operand.hbm [shape: f32[128,256], index: 5, kind: input, shape index: {}]
  %s6 = inlined_call_operand.vmem [shape: f32[1,256], index: 6, kind: input, shape index: {}]
  %s7 = inlined_call_operand.hbm [shape: f32[256,128], index: 7, kind: input, shape index: {}]
  %s8 = inlined_call_operand.hbm [shape: f32[1,128], index: 8, kind: input, shape index: {}]
  %s9 = inlined_call_operand.vmem [shape: f32[8,256], index: 9, kind: output, shape index: {}]
  %s10 = sld [smem:[#allocation0]]
  $region70: #{initial_model_packed.1} parent=0
    _
  %s12 = ssub.s32 1, %s10
  %s13 = scalar_select 0, %s12, %s10
  $region1: #{initial_model_packed.1} parent=0
    #allocation2 [shape = 'u8[512]{0}', space=vmem, size = 0x400, scoped, tag = 'input window, operand 2, single buffered']
    #allocation3 [shape = 's32[1]{0}', space=sflag, size = 0x4, scoped, tag = 'scoped memory for initial_model_packed.1']
    #allocation4 [shape = 'u8[65536]{0}', space=vmem, size = 0x10000, scoped, tag = 'input window, operand 3, single buffered']
    #allocation5 [shape = 's32[1]{0}', space=sflag, size = 0x4, scoped, tag = 'scoped memory for initial_model_packed.1']
    #allocation6 [shape = 'u8[512]{0}', space=vmem, size = 0x400, scoped, tag = 'input window, operand 4, single buffered']
    #allocation7 [shape = 'u8[131072]{0}', space=vmem, size = 0x20000, scoped, tag = 'input window, operand 5, single buffered']
    #allocation8 [shape = 's32[1]{0}', space=sflag, size = 0x4, scoped, tag = 'scoped memory for initial_model_packed.1']
    #allocation9 [shape = 'u8[131072]{0}', space=vmem, size = 0x20000, scoped, tag = 'input window, operand 7, single buffered']
    #allocation10 [shape = 'u8[512]{0}', space=vmem, size = 0x400, scoped, tag = 'input window, operand 8, single buffered']
    #allocation11 [shape = 's32[1]{0}', space=sflag, size = 0x4, scoped, tag = 'scoped memory for initial_model_packed.1']
    %14 = vsyncpa [#allocation3], 0
    %15 = vsyncpa [#allocation5], 0
    %16 = vsyncpa [#allocation8], 0
    %17 = vsyncpa [#allocation11], 0
    // Predicated region
    $region2: #{initial_model_packed.1} parent=1 // pred_check
      _
    $region3: #{initial_model_packed.1} parent=1 // pred_check_branch
      %19 = sbr.rel (0) target = $region5
    $region4: #{initial_model_packed.1} parent=1 // pred_region
      _
    $region5: #{initial_model_packed.1} parent=1 // pred_fallthru
      _
    // Predicated region
    $region6: #{initial_model_packed.1} parent=1 // pred_check
      _
    $region7: #{initial_model_packed.1} parent=1 // pred_check_branch
      %21 = sbr.rel (0) target = $region9
    $region8: #{initial_model_packed.1} parent=1 // pred_region
      _
    $region9: #{initial_model_packed.1} parent=1 // pred_fallthru
      _
    // Predicated region
    $region10: #{initial_model_packed.1} parent=1 // pred_check
      _
    $region11: #{initial_model_packed.1} parent=1 // pred_check_branch
      %23 = sbr.rel (0) target = $region13
    $region12: #{initial_model_packed.1} parent=1 // pred_region
      %s25 = ssub.s32 16, 16
      %26 = vsyncadd [#allocation3], %s25
      %s28 = sshll.u32 [#allocation2], 4
      %s29 = int_to_ptr.vmem [resolvable:$true] %s28
      %31 = dma.hbm_to_vmem [thread:$0]  %s2, 16, %s29, [#allocation3]
    $region13: #{initial_model_packed.1} parent=1 // pred_fallthru
      _
    // Predicated region
    $region14: #{initial_model_packed.1} parent=1 // pred_check
      _
    $region15: #{initial_model_packed.1} parent=1 // pred_check_branch
      %33 = sbr.rel (0) target = $region17
    $region16: #{initial_model_packed.1} parent=1 // pred_region
      %s35 = ssub.s32 2048, 2048
      %36 = vsyncadd [#allocation5], %s35
      %s37 = sshll.u32 [#allocation4], 4
      %s38 = int_to_ptr.vmem [resolvable:$true] %s37
      %43 = dma.hbm_to_vmem [thread:$0]  %s3, 2048, %s38, [#allocation5], 128, 128, 8
    $region17: #{initial_model_packed.1} parent=1 // pred_fallthru
      _
    // Predicated region
    $region18: #{initial_model_packed.1} parent=1 // pred_check
      _
    $region19: #{initial_model_packed.1} parent=1 // pred_check_branch
      %45 = sbr.rel (0) target = $region21
    $region20: #{initial_model_packed.1} parent=1 // pred_region
      %s47 = ssub.s32 16, 16
      %48 = vsyncadd [#allocation5], %s47
      %s50 = sshll.u32 [#allocation6], 4
      %s51 = int_to_ptr.vmem [resolvable:$true] %s50
      %53 = dma.hbm_to_vmem [thread:$0]  %s4, 16, %s51, [#allocation5]
    $region21: #{initial_model_packed.1} parent=1 // pred_fallthru
      _
    // Predicated region
    $region22: #{initial_model_packed.1} parent=1 // pred_check
      _
    $region23: #{initial_model_packed.1} parent=1 // pred_check_branch
      %55 = sbr.rel (0) target = $region25
    $region24: #{initial_model_packed.1} parent=1 // pred_region
      %s57 = ssub.s32 4096, 4096
      %58 = vsyncadd [#allocation8], %s57
      %s59 = sshll.u32 [#allocation7], 4
      %s60 = int_to_ptr.vmem [resolvable:$true] %s59
      %65 = dma.hbm_to_vmem [thread:$0]  %s5, 4096, %s60, [#allocation8], 256, 256, 16
    $region25: #{initial_model_packed.1} parent=1 // pred_fallthru
      _
    // Predicated region
    $region26: #{initial_model_packed.1} parent=1 // pred_check
      _
    $region27: #{initial_model_packed.1} parent=1 // pred_check_branch
      %67 = sbr.rel (0) target = $region29
    $region28: #{initial_model_packed.1} parent=1 // pred_region
      _
    $region29: #{initial_model_packed.1} parent=1 // pred_fallthru
      _
    // Predicated region
    $region30: #{initial_model_packed.1} parent=1 // pred_check
      _
    $region31: #{initial_model_packed.1} parent=1 // pred_check_branch
      %69 = sbr.rel (0) target = $region33
    $region32: #{initial_model_packed.1} parent=1 // pred_region
      %s71 = ssub.s32 4096, 4096
      %72 = vsyncadd [#allocation8], %s71
      %s73 = sshll.u32 [#allocation9], 4
      %s74 = int_to_ptr.vmem [resolvable:$true] %s73
      %79 = dma.hbm_to_vmem [thread:$0]  %s7, 4096, %s74, [#allocation8], 128, 128, 8
    $region33: #{initial_model_packed.1} parent=1 // pred_fallthru
      _
    // Predicated region
    $region34: #{initial_model_packed.1} parent=1 // pred_check
      _
    $region35: #{initial_model_packed.1} parent=1 // pred_check_branch
      %81 = sbr.rel (0) target = $region37
    $region36: #{initial_model_packed.1} parent=1 // pred_region
      %s83 = ssub.s32 16, 16
      %84 = vsyncadd [#allocation11], %s83
      %s86 = sshll.u32 [#allocation10], 4
      %s87 = int_to_ptr.vmem [resolvable:$true] %s86
      %89 = dma.hbm_to_vmem [thread:$0]  %s8, 16, %s87, [#allocation11]
    $region37: #{initial_model_packed.1} parent=1 // pred_fallthru
      _
    // Predicated region
    $region38: #{initial_model_packed.1} parent=1 // pred_check
      _
    $region39: #{initial_model_packed.1} parent=1 // pred_check_branch
      %91 = sbr.rel (0) target = $region41
    $region40: #{initial_model_packed.1} parent=1 // pred_region
      %92 = dma.done [#allocation3], 16
    $region41: #{initial_model_packed.1} parent=1 // pred_fallthru
      _
    // Predicated region
    $region42: #{initial_model_packed.1} parent=1 // pred_check
      _
    $region43: #{initial_model_packed.1} parent=1 // pred_check_branch
      %94 = sbr.rel (0) target = $region45
    $region44: #{initial_model_packed.1} parent=1 // pred_region
      %95 = dma.done [#allocation5], 2048
    $region45: #{initial_model_packed.1} parent=1 // pred_fallthru
      _
    // Predicated region
    $region46: #{initial_model_packed.1} parent=1 // pred_check
      _
    $region47: #{initial_model_packed.1} parent=1 // pred_check_branch
      %97 = sbr.rel (0) target = $region49
    $region48: #{initial_model_packed.1} parent=1 // pred_region
      %98 = dma.done [#allocation5], 16
    $region49: #{initial_model_packed.1} parent=1 // pred_fallthru
      _
    // Predicated region
    $region50: #{initial_model_packed.1} parent=1 // pred_check
      _
    $region51: #{initial_model_packed.1} parent=1 // pred_check_branch
      %100 = sbr.rel (0) target = $region53
    $region52: #{initial_model_packed.1} parent=1 // pred_region
      %101 = dma.done [#allocation8], 4096
    $region53: #{initial_model_packed.1} parent=1 // pred_fallthru
      _
    // Predicated region
    $region54: #{initial_model_packed.1} parent=1 // pred_check
      _
    $region55: #{initial_model_packed.1} parent=1 // pred_check_branch
      %103 = sbr.rel (0) target = $region57
    $region56: #{initial_model_packed.1} parent=1 // pred_region
      %104 = dma.done [#allocation8], 4096
    $region57: #{initial_model_packed.1} parent=1 // pred_fallthru
      _
    // Predicated region
    $region58: #{initial_model_packed.1} parent=1 // pred_check
      _
    $region59: #{initial_model_packed.1} parent=1 // pred_check_branch
      %106 = sbr.rel (0) target = $region61
    $region60: #{initial_model_packed.1} parent=1 // pred_region
      %107 = dma.done [#allocation11], 16
    $region61: #{initial_model_packed.1} parent=1 // pred_fallthru
      _
    %v108 = vld [vmem:[%s0] sm:$0xff]
    %v109 = vld [vmem:[%s1] sm:$0xff]
    %v110 = vld [vmem:[%s1 + $0x8] sm:$0xff]
    %v111 = vld [vmem:[#allocation2] sm:$0x1]
    %v113 = vlaneseq
    %v114 = vshrl.u32 %v113, 7
    %v115 = vsub.s32 0, %v114
    %v116 = vrot.slane %v111, %v115
    %vm118 = vcmask 130048
    %v120 = vsel %vm118, %v108, 0
    %122 = vmatprep.subr.mxu0 0.0
    %123 = vmatpush1.msra.mxu0 %v109
    %124 = vmatprep.subr.mxu0 0.0
    %125 = vmatpush1.msra.mxu0 %v110
    %126 = vmatprep.subr.mxu0 0.0
    %127 = vmatpush1.msra.mxu0 0.0
    %128 = vmatprep.subr.mxu0 0.0
    %129 = vmatpush1.msra.mxu0 0.0
    %130 = vmatprep.subr.mxu0 0.0
    %131 = vmatpush1.msra.mxu0 0.0
    %132 = vmatprep.subr.mxu0 0.0
    %133 = vmatpush1.msra.mxu0 0.0
    %134 = vmatprep.subr.mxu0 0.0
    %135 = vmatpush1.msra.mxu0 0.0
    %136 = vmatprep.subr.mxu0 0.0
    %137 = vmatpush1.msra.mxu0 0.0
    %138 = vmatprep.subr.mxu0 0.0
    %139 = vmatpush1.msra.mxu0 0.0
    %140 = vmatprep.subr.mxu0 0.0
    %141 = vmatpush1.msra.mxu0 0.0
    %142 = vmatprep.subr.mxu0 0.0
    %143 = vmatpush1.msra.mxu0 0.0
    %144 = vmatprep.subr.mxu0 0.0
    %145 = vmatpush1.msra.mxu0 0.0
    %146 = vmatprep.subr.mxu0 0.0
    %147 = vmatpush1.msra.mxu0 0.0
    %148 = vmatprep.subr.mxu0 0.0
    %149 = vmatpush1.msra.mxu0 0.0
    %150 = vmatprep.subr.mxu0 0.0
    %151 = vmatpush1.msra.mxu0 0.0
    %152 = vmatprep.subr.mxu0 0.0
    %153 = vmatpush1.msra.mxu0 0.0
    %154 = vmatprep.subr.mxu0 0.0
    %155 = vmatpush1.msra.mxu0 0.0
    %156 = vmatprep.subr.mxu0 0.0
    %157 = vmatpush1.msra.mxu0 0.0
    %158 = vmatprep.subr.mxu0 0.0
    %159 = vmatpush1.msra.mxu0 0.0
    %160 = vmatprep.subr.mxu0 0.0
    %161 = vmatpush1.msra.mxu0 0.0
    %162 = vmatprep.subr.mxu0 0.0
    %163 = vmatpush1.msra.mxu0 0.0
    %164 = vmatprep.subr.mxu0 0.0
    %165 = vmatpush1.msra.mxu0 0.0
    %166 = vmatprep.subr.mxu0 0.0
    %167 = vmatpush1.msra.mxu0 0.0
    %168 = vmatprep.subr.mxu0 0.0
    %169 = vmatpush1.msra.mxu0 0.0
    %170 = vmatprep.subr.mxu0 0.0
    %171 = vmatpush1.msra.mxu0 0.0
    %172 = vmatprep.subr.mxu0 0.0
    %173 = vmatpush1.msra.mxu0 0.0
    %174 = vmatprep.subr.mxu0 0.0
    %175 = vmatpush1.msra.mxu0 0.0
    %176 = vmatprep.subr.mxu0 0.0
    %177 = vmatpush1.msra.mxu0 0.0
    %178 = vmatprep.subr.mxu0 0.0
    %179 = vmatpush1.msra.mxu0 0.0
    %180 = vmatprep.subr.mxu0 0.0
    %181 = vmatpush1.msra.mxu0 0.0
    %182 = vmatprep.subr.mxu0 0.0
    %183 = vmatpush1.msra.mxu0 0.0
    %184 = vmatprep.subr.mxu0 0.0
    %185 = vmatpush1.msra.mxu0 0.0
    %186 = vmatprep.mubr.f32.mxu0 0.0
    %187 = vmatmul.mubr.f32.gmra.mrb[0].mxu0 %v120
    %v188 = vpop.f32.mrb[0].mxu0
    %v189 = vadd.f32 %v116, %v188
    %v190 = vpop.f32.mrb[0].mxu0
    %191 = vdwg.mxu0
    %v192 = vmax.f32 %v189, 0.0
    %v193 = vld [vmem:[#allocation4] sm:$0xff]
    %v194 = vld [vmem:[#allocation4 + $0x8] sm:$0xff]
    %v195 = vld [vmem:[#allocation4 + $0x10] sm:$0xff]
    %v196 = vld [vmem:[#allocation4 + $0x18] sm:$0xff]
    %v197 = vld [vmem:[#allocation4 + $0x20] sm:$0xff]
    %v198 = vld [vmem:[#allocation4 + $0x28] sm:$0xff]
    %v199 = vld [vmem:[#allocation4 + $0x30] sm:$0xff]
    %v200 = vld [vmem:[#allocation4 + $0x38] sm:$0xff]
    %v201 = vld [vmem:[#allocation4 + $0x40] sm:$0xff]
    %v202 = vld [vmem:[#allocation4 + $0x48] sm:$0xff]
    %v203 = vld [vmem:[#allocation4 + $0x50] sm:$0xff]
    %v204 = vld [vmem:[#allocation4 + $0x58] sm:$0xff]
    %v205 = vld [vmem:[#allocation4 + $0x60] sm:$0xff]
    %v206 = vld [vmem:[#allocation4 + $0x68] sm:$0xff]
    %v207 = vld [vmem:[#allocation4 + $0x70] sm:$0xff]
    %v208 = vld [vmem:[#allocation4 + $0x78] sm:$0xff]
    %v209 = vld [vmem:[#allocation6] sm:$0x1]
    %v211 = vlaneseq
    %v212 = vshrl.u32 %v211, 7
    %v213 = vsub.s32 0, %v212
    %v214 = vrot.slane %v209, %v213
    %216 = vmatprep.subr.mxu0 0.0
    %217 = vmatpush1.msra.mxu0 %v193
    %218 = vmatprep.subr.mxu0 0.0
    %219 = vmatpush1.msra.mxu0 %v194
    %220 = vmatprep.subr.mxu0 0.0
    %221 = vmatpush1.msra.mxu0 %v195
    %222 = vmatprep.subr.mxu0 0.0
    %223 = vmatpush1.msra.mxu0 %v196
    %224 = vmatprep.subr.mxu0 0.0
    %225 = vmatpush1.msra.mxu0 %v197
    %226 = vmatprep.subr.mxu0 0.0
    %227 = vmatpush1.msra.mxu0 %v198
    %228 = vmatprep.subr.mxu0 0.0
    %229 = vmatpush1.msra.mxu0 %v199
    %230 = vmatprep.subr.mxu0 0.0
    %231 = vmatpush1.msra.mxu0 %v200
    %232 = vmatprep.subr.mxu0 0.0
    %233 = vmatpush1.msra.mxu0 %v201
    %234 = vmatprep.subr.mxu0 0.0
    %235 = vmatpush1.msra.mxu0 %v202
    %236 = vmatprep.subr.mxu0 0.0
    %237 = vmatpush1.msra.mxu0 %v203
    %238 = vmatprep.subr.mxu0 0.0
    %239 = vmatpush1.msra.mxu0 %v204
    %240 = vmatprep.subr.mxu0 0.0
    %241 = vmatpush1.msra.mxu0 %v205
    %242 = vmatprep.subr.mxu0 0.0
    %243 = vmatpush1.msra.mxu0 %v206
    %244 = vmatprep.subr.mxu0 0.0
    %245 = vmatpush1.msra.mxu0 %v207
    %246 = vmatprep.subr.mxu0 0.0
    %247 = vmatpush1.msra.mxu0 %v208
    %248 = vmatprep.subr.mxu0 0.0
    %249 = vmatpush1.msra.mxu0 0.0
    %250 = vmatprep.subr.mxu0 0.0
    %251 = vmatpush1.msra.mxu0 0.0
    %252 = vmatprep.subr.mxu0 0.0
    %253 = vmatpush1.msra.mxu0 0.0
    %254 = vmatprep.subr.mxu0 0.0
    %255 = vmatpush1.msra.mxu0 0.0
    %256 = vmatprep.subr.mxu0 0.0
    %257 = vmatpush1.msra.mxu0 0.0
    %258 = vmatprep.subr.mxu0 0.0
    %259 = vmatpush1.msra.mxu0 0.0
    %260 = vmatprep.subr.mxu0 0.0
    %261 = vmatpush1.msra.mxu0 0.0
    %262 = vmatprep.subr.mxu0 0.0
    %263 = vmatpush1.msra.mxu0 0.0
    %264 = vmatprep.subr.mxu0 0.0
    %265 = vmatpush1.msra.mxu0 0.0
    %266 = vmatprep.subr.mxu0 0.0
    %267 = vmatpush1.msra.mxu0 0.0
    %268 = vmatprep.subr.mxu0 0.0
    %269 = vmatpush1.msra.mxu0 0.0
    %270 = vmatprep.subr.mxu0 0.0
    %271 = vmatpush1.msra.mxu0 0.0
    %272 = vmatprep.subr.mxu0 0.0
    %273 = vmatpush1.msra.mxu0 0.0
    %274 = vmatprep.subr.mxu0 0.0
    %275 = vmatpush1.msra.mxu0 0.0
    %276 = vmatprep.subr.mxu0 0.0
    %277 = vmatpush1.msra.mxu0 0.0
    %278 = vmatprep.subr.mxu0 0.0
    %279 = vmatpush1.msra.mxu0 0.0
    %280 = vmatprep.mubr.f32.mxu0 0.0
    %281 = vmatmul.mubr.f32.gmra.mrb[0].mxu0 %v192
    %v282 = vpop.f32.mrb[0].mxu0
    %v283 = vadd.f32 %v214, %v282
    %v284 = vpop.f32.mrb[0].mxu0
    %285 = vdwg.mxu0
    %v286 = vld [vmem:[#allocation7] sm:$0xff]
    %v287 = vld [vmem:[#allocation7 + $0x8] sm:$0xff]
    %v288 = vld [vmem:[#allocation7 + $0x10] sm:$0xff]
    %v289 = vld [vmem:[#allocation7 + $0x18] sm:$0xff]
    %v290 = vld [vmem:[#allocation7 + $0x20] sm:$0xff]
    %v291 = vld [vmem:[#allocation7 + $0x28] sm:$0xff]
    %v292 = vld [vmem:[#allocation7 + $0x30] sm:$0xff]
    %v293 = vld [vmem:[#allocation7 + $0x38] sm:$0xff]
    %v294 = vld [vmem:[#allocation7 + $0x40] sm:$0xff]
    %v295 = vld [vmem:[#allocation7 + $0x48] sm:$0xff]
    %v296 = vld [vmem:[#allocation7 + $0x50] sm:$0xff]
    %v297 = vld [vmem:[#allocation7 + $0x58] sm:$0xff]
    %v298 = vld [vmem:[#allocation7 + $0x60] sm:$0xff]
    %v299 = vld [vmem:[#allocation7 + $0x68] sm:$0xff]
    %v300 = vld [vmem:[#allocation7 + $0x70] sm:$0xff]
    %v301 = vld [vmem:[#allocation7 + $0x78] sm:$0xff]
    %v302 = vld [vmem:[#allocation7 + $0x80] sm:$0xff]
    %v303 = vld [vmem:[#allocation7 + $0x88] sm:$0xff]
    %v304 = vld [vmem:[#allocation7 + $0x90] sm:$0xff]
    %v305 = vld [vmem:[#allocation7 + $0x98] sm:$0xff]
    %v306 = vld [vmem:[#allocation7 + $0xa0] sm:$0xff]
    %v307 = vld [vmem:[#allocation7 + $0xa8] sm:$0xff]
    %v308 = vld [vmem:[#allocation7 + $0xb0] sm:$0xff]
    %v309 = vld [vmem:[#allocation7 + $0xb8] sm:$0xff]
    %v310 = vld [vmem:[#allocation7 + $0xc0] sm:$0xff]
    %v311 = vld [vmem:[#allocation7 + $0xc8] sm:$0xff]
    %v312 = vld [vmem:[#allocation7 + $0xd0] sm:$0xff]
    %v313 = vld [vmem:[#allocation7 + $0xd8] sm:$0xff]
    %v314 = vld [vmem:[#allocation7 + $0xe0] sm:$0xff]
    %v315 = vld [vmem:[#allocation7 + $0xe8] sm:$0xff]
    %v316 = vld [vmem:[#allocation7 + $0xf0] sm:$0xff]
    %v317 = vld [vmem:[#allocation7 + $0xf8] sm:$0xff]
    %v318 = vld [vmem:[%s6] sm:$0x3]
    %v320 = vlaneseq
    %v321 = vshrl.u32 %v320, 7
    %v322 = vsub.s32 0, %v321
    %v323 = vrot.slane %v318, %v322
    %v324 = vlaneseq
    %v325 = vshrl.u32 %v324, 7
    %v326 = vsub.s32 1, %v325
    %v327 = vrot.slane %v318, %v326
    %330 = vmatprep.subr.mxu0 %v287
    %331 = vmatpush1.msra.mxu0 %v286
    %332 = vmatprep.subr.mxu0 %v289
    %333 = vmatpush1.msra.mxu0 %v288
    %334 = vmatprep.subr.mxu0 %v291
    %335 = vmatpush1.msra.mxu0 %v290
    %336 = vmatprep.subr.mxu0 %v293
    %337 = vmatpush1.msra.mxu0 %v292
    %338 = vmatprep.subr.mxu0 %v295
    %339 = vmatpush1.msra.mxu0 %v294
    %340 = vmatprep.subr.mxu0 %v297
    %341 = vmatpush1.msra.mxu0 %v296
    %342 = vmatprep.subr.mxu0 %v299
    %343 = vmatpush1.msra.mxu0 %v298
    %344 = vmatprep.subr.mxu0 %v301
    %345 = vmatpush1.msra.mxu0 %v300
    %346 = vmatprep.subr.mxu0 %v303
    %347 = vmatpush1.msra.mxu0 %v302
    %348 = vmatprep.subr.mxu0 %v305
    %349 = vmatpush1.msra.mxu0 %v304
    %350 = vmatprep.subr.mxu0 %v307
    %351 = vmatpush1.msra.mxu0 %v306
    %352 = vmatprep.subr.mxu0 %v309
    %353 = vmatpush1.msra.mxu0 %v308
    %354 = vmatprep.subr.mxu0 %v311
    %355 = vmatpush1.msra.mxu0 %v310
    %356 = vmatprep.subr.mxu0 %v313
    %357 = vmatpush1.msra.mxu0 %v312
    %358 = vmatprep.subr.mxu0 %v315
    %359 = vmatpush1.msra.mxu0 %v314
    %360 = vmatprep.subr.mxu0 %v317
    %361 = vmatpush1.msra.mxu0 %v316
    %362 = vmatprep.subr.mxu0 0.0
    %363 = vmatpush1.msra.mxu0 0.0
    %364 = vmatprep.subr.mxu0 0.0
    %365 = vmatpush1.msra.mxu0 0.0
    %366 = vmatprep.subr.mxu0 0.0
    %367 = vmatpush1.msra.mxu0 0.0
    %368 = vmatprep.subr.mxu0 0.0
    %369 = vmatpush1.msra.mxu0 0.0
    %370 = vmatprep.subr.mxu0 0.0
    %371 = vmatpush1.msra.mxu0 0.0
    %372 = vmatprep.subr.mxu0 0.0
    %373 = vmatpush1.msra.mxu0 0.0
    %374 = vmatprep.subr.mxu0 0.0
    %375 = vmatpush1.msra.mxu0 0.0
    %376 = vmatprep.subr.mxu0 0.0
    %377 = vmatpush1.msra.mxu0 0.0
    %378 = vmatprep.subr.mxu0 0.0
    %379 = vmatpush1.msra.mxu0 0.0
    %380 = vmatprep.subr.mxu0 0.0
    %381 = vmatpush1.msra.mxu0 0.0
    %382 = vmatprep.subr.mxu0 0.0
    %383 = vmatpush1.msra.mxu0 0.0
    %384 = vmatprep.subr.mxu0 0.0
    %385 = vmatpush1.msra.mxu0 0.0
    %386 = vmatprep.subr.mxu0 0.0
    %387 = vmatpush1.msra.mxu0 0.0
    %388 = vmatprep.subr.mxu0 0.0
    %389 = vmatpush1.msra.mxu0 0.0
    %390 = vmatprep.subr.mxu0 0.0
    %391 = vmatpush1.msra.mxu0 0.0
    %392 = vmatprep.subr.mxu0 0.0
    %393 = vmatpush1.msra.mxu0 0.0
    %394 = vmatprep.mubr.f32.mxu0 0.0
    %395 = vmatmul.mubr.f32.gmra.mrb[0].mxu0 %v192
    %v396 = vpop.f32.mrb[0].mxu0
    %v397 = vadd.f32 %v323, %v396
    %v398 = vpop.f32.mrb[0].mxu0
    %v399 = vadd.f32 %v327, %v398
    %400 = vdwg.mxu0
    %v401 = vmax.f32 %v397, 0.0
    %v402 = vmax.f32 %v399, 0.0
    %v403 = vld [vmem:[#allocation9] sm:$0xff]
    %v404 = vld [vmem:[#allocation9 + $0x8] sm:$0xff]
    %v405 = vld [vmem:[#allocation9 + $0x10] sm:$0xff]
    %v406 = vld [vmem:[#allocation9 + $0x18] sm:$0xff]
    %v407 = vld [vmem:[#allocation9 + $0x20] sm:$0xff]
    %v408 = vld [vmem:[#allocation9 + $0x28] sm:$0xff]
    %v409 = vld [vmem:[#allocation9 + $0x30] sm:$0xff]
    %v410 = vld [vmem:[#allocation9 + $0x38] sm:$0xff]
    %v411 = vld [vmem:[#allocation9 + $0x40] sm:$0xff]
    %v412 = vld [vmem:[#allocation9 + $0x48] sm:$0xff]
    %v413 = vld [vmem:[#allocation9 + $0x50] sm:$0xff]
    %v414 = vld [vmem:[#allocation9 + $0x58] sm:$0xff]
    %v415 = vld [vmem:[#allocation9 + $0x60] sm:$0xff]
    %v416 = vld [vmem:[#allocation9 + $0x68] sm:$0xff]
    %v417 = vld [vmem:[#allocation9 + $0x70] sm:$0xff]
    %v418 = vld [vmem:[#allocation9 + $0x78] sm:$0xff]
    %v419 = vld [vmem:[#allocation9 + $0x80] sm:$0xff]
    %v420 = vld [vmem:[#allocation9 + $0x88] sm:$0xff]
    %v421 = vld [vmem:[#allocation9 + $0x90] sm:$0xff]
    %v422 = vld [vmem:[#allocation9 + $0x98] sm:$0xff]
    %v423 = vld [vmem:[#allocation9 + $0xa0] sm:$0xff]
    %v424 = vld [vmem:[#allocation9 + $0xa8] sm:$0xff]
    %v425 = vld [vmem:[#allocation9 + $0xb0] sm:$0xff]
    %v426 = vld [vmem:[#allocation9 + $0xb8] sm:$0xff]
    %v427 = vld [vmem:[#allocation9 + $0xc0] sm:$0xff]
    %v428 = vld [vmem:[#allocation9 + $0xc8] sm:$0xff]
    %v429 = vld [vmem:[#allocation9 + $0xd0] sm:$0xff]
    %v430 = vld [vmem:[#allocation9 + $0xd8] sm:$0xff]
    %v431 = vld [vmem:[#allocation9 + $0xe0] sm:$0xff]
    %v432 = vld [vmem:[#allocation9 + $0xe8] sm:$0xff]
    %v433 = vld [vmem:[#allocation9 + $0xf0] sm:$0xff]
    %v434 = vld [vmem:[#allocation9 + $0xf8] sm:$0xff]
    %v435 = vld [vmem:[#allocation10] sm:$0x1]
    %v437 = vlaneseq
    %v438 = vshrl.u32 %v437, 7
    %v439 = vsub.s32 0, %v438
    %v440 = vrot.slane %v435, %v439
    %442 = vmatprep.subr.mxu0 0.0
    %443 = vmatpush1.msra.mxu0 %v403
    %444 = vmatprep.subr.mxu0 0.0
    %445 = vmatpush1.msra.mxu0 %v404
    %446 = vmatprep.subr.mxu0 0.0
    %447 = vmatpush1.msra.mxu0 %v405
    %448 = vmatprep.subr.mxu0 0.0
    %449 = vmatpush1.msra.mxu0 %v406
    %450 = vmatprep.subr.mxu0 0.0
    %451 = vmatpush1.msra.mxu0 %v407
    %452 = vmatprep.subr.mxu0 0.0
    %453 = vmatpush1.msra.mxu0 %v408
    %454 = vmatprep.subr.mxu0 0.0
    %455 = vmatpush1.msra.mxu0 %v409
    %456 = vmatprep.subr.mxu0 0.0
    %457 = vmatpush1.msra.mxu0 %v410
    %458 = vmatprep.subr.mxu0 0.0
    %459 = vmatpush1.msra.mxu0 %v411
    %460 = vmatprep.subr.mxu0 0.0
    %461 = vmatpush1.msra.mxu0 %v412
    %462 = vmatprep.subr.mxu0 0.0
    %463 = vmatpush1.msra.mxu0 %v413
    %464 = vmatprep.subr.mxu0 0.0
    %465 = vmatpush1.msra.mxu0 %v414
    %466 = vmatprep.subr.mxu0 0.0
    %467 = vmatpush1.msra.mxu0 %v415
    %468 = vmatprep.subr.mxu0 0.0
    %469 = vmatpush1.msra.mxu0 %v416
    %470 = vmatprep.subr.mxu0 0.0
    %471 = vmatpush1.msra.mxu0 %v417
    %472 = vmatprep.subr.mxu0 0.0
    %473 = vmatpush1.msra.mxu0 %v418
    %474 = vmatprep.subr.mxu0 0.0
    %475 = vmatpush1.msra.mxu0 %v419
    %476 = vmatprep.subr.mxu0 0.0
    %477 = vmatpush1.msra.mxu0 %v420
    %478 = vmatprep.subr.mxu0 0.0
    %479 = vmatpush1.msra.mxu0 %v421
    %480 = vmatprep.subr.mxu0 0.0
    %481 = vmatpush1.msra.mxu0 %v422
    %482 = vmatprep.subr.mxu0 0.0
    %483 = vmatpush1.msra.mxu0 %v423
    %484 = vmatprep.subr.mxu0 0.0
    %485 = vmatpush1.msra.mxu0 %v424
    %486 = vmatprep.subr.mxu0 0.0
    %487 = vmatpush1.msra.mxu0 %v425
    %488 = vmatprep.subr.mxu0 0.0
    %489 = vmatpush1.msra.mxu0 %v426
    %490 = vmatprep.subr.mxu0 0.0
    %491 = vmatpush1.msra.mxu0 %v427
    %492 = vmatprep.subr.mxu0 0.0
    %493 = vmatpush1.msra.mxu0 %v428
    %494 = vmatprep.subr.mxu0 0.0
    %495 = vmatpush1.msra.mxu0 %v429
    %496 = vmatprep.subr.mxu0 0.0
    %497 = vmatpush1.msra.mxu0 %v430
    %498 = vmatprep.subr.mxu0 0.0
    %499 = vmatpush1.msra.mxu0 %v431
    %500 = vmatprep.subr.mxu0 0.0
    %501 = vmatpush1.msra.mxu0 %v432
    %502 = vmatprep.subr.mxu0 0.0
    %503 = vmatpush1.msra.mxu0 %v433
    %504 = vmatprep.subr.mxu0 0.0
    %505 = vmatpush1.msra.mxu0 %v434
    %506 = vmatprep.mubr.f32.mxu0 %v402
    %507 = vmatmul.mubr.f32.gmra.mrb[0].mxu0 %v401
    %v508 = vpop.f32.mrb[0].mxu0
    %v509 = vadd.f32 %v440, %v508
    %v510 = vpop.f32.mrb[0].mxu0
    %511 = vdwg.mxu0
    %512 = vst [vmem:[%s9] sm:$0xff] %v283
    %513 = vst [vmem:[%s9 + $0x8] sm:$0xff] %v509
    // Predicated region
    $region62: #{initial_model_packed.1} parent=1 // pred_check
      _
    $region63: #{initial_model_packed.1} parent=1 // pred_check_branch
      %515 = sbr.rel (0) target = $region65
    $region64: #{initial_model_packed.1} parent=1 // pred_region
      _
    $region65: #{initial_model_packed.1} parent=1 // pred_fallthru
      _
    // Predicated region
    $region66: #{initial_model_packed.1} parent=1 // pred_check
      _
    $region67: #{initial_model_packed.1} parent=1 // pred_check_branch
      %517 = sbr.rel (0) target = $region69
    $region68: #{initial_model_packed.1} parent=1 // pred_region
      _
    $region69: #{initial_model_packed.1} parent=1 // pred_fallthru
      _
    %518 = vsyncpa [#allocation3], 1
    %519 = vsyncpa [#allocation5], 1
    %520 = vsyncpa [#allocation8], 1
    %521 = vsyncpa [#allocation11], 1

</llo_original>
